<compile_context>
chip_gen: v6e
topology: v6e:2x2x1
jax: 0.10.0
libtpu: 0.0.40
codegen_flags: <defaults>
</compile_context>

<pallas_src>
import functools

import jax
import jax.numpy as jnp
from jax.experimental import pallas as pl
from jax.experimental.pallas import tpu as pltpu


def _focal_loss_kernel(logits_ref, targets_ref, partial_ref, *, gamma, n_valid, tile_n):
    # logits_ref: (TILE_N, C) in the HBM dtype ; targets_ref: (TILE_N, 1) int32
    x = logits_ref[...].astype(jnp.float32)                       # (TILE_N, C)
    t = targets_ref[...]                                          # (TILE_N, 1)

    # Numerically-stable log-sum-exp along the class (lane) axis.
    m = jnp.max(x, axis=-1, keepdims=True)                        # (TILE_N, 1)
    z = x - m
    sum_ez = jnp.sum(jnp.exp(z), axis=-1, keepdims=True)          # (TILE_N, 1)
    lse = jnp.log(sum_ez)

    # Gather z at the target class via iota/compare mask (no full log-softmax).
    class_ids = jax.lax.broadcasted_iota(jnp.int32, x.shape, 1)   # (TILE_N, C)
    z_t = jnp.sum(jnp.where(class_ids == t, z, 0.0), axis=-1, keepdims=True)
    logpt = z_t - lse                                             # (TILE_N, 1)
    pt = jnp.exp(logpt)
    one_minus_pt = jnp.maximum(1.0 - pt, 0.0)

    # Focal weight: integer gamma -> short VPU multiply chain (frees the EUP).
    if float(gamma) == int(gamma) and gamma >= 0:
        w = jnp.ones_like(one_minus_pt)
        for _ in range(int(gamma)):
            w = w * one_minus_pt
    else:
        w = one_minus_pt ** jnp.float32(gamma)

    loss = -w * logpt                                             # (TILE_N, 1)

    # Mask rows beyond N (partial tail tile reads unspecified data; the false
    # branch of jnp.where does not propagate it).
    row_ids = (pl.program_id(0) * tile_n
               + jax.lax.broadcasted_iota(jnp.int32, loss.shape, 0))
    loss = jnp.where(row_ids < n_valid, loss, 0.0)

    # Per-tile partial sum, broadcast to a lane-dense (1, 8, 128) slab.
    partial_ref[...] = jnp.broadcast_to(jnp.sum(loss), partial_ref.shape)


# Per-input-buffer VMEM budget: double-buffered this stays well under the
# scoped limits on v5e / v6e (128 MiB phys) and v7x (64 MiB phys).
_PER_BUFFER_BYTES = 6 * 1024 * 1024


def _pick_tile_n(n, c, itemsize):
    max_rows = max(8, _PER_BUFFER_BYTES // max(1, c * itemsize))
    tile = min(max(n, 8), max_rows, 1024)
    tile = max(8, (tile // 8) * 8)          # sublane dim: multiple of 8
    return tile


def focal_loss(outputs, targets, *, gamma=2.0):
    """outputs: (N, C) float32/bfloat16 logits; targets: (N,) int class ids."""
    n, c = outputs.shape
    itemsize = jnp.dtype(outputs.dtype).itemsize
    tile_n = _pick_tile_n(n, c, itemsize)
    num_tiles = pl.cdiv(n, tile_n)

    targets2d = targets.astype(jnp.int32).reshape(n, 1)

    kernel = functools.partial(
        _focal_loss_kernel, gamma=float(gamma), n_valid=n, tile_n=tile_n)

    cost = pl.CostEstimate(
        flops=5 * n * c,
        transcendentals=n * c + 2 * n,
        bytes_accessed=n * c * itemsize + n * 4 + num_tiles * 8 * 128 * 4,
    )

    partials = pl.pallas_call(
        kernel,
        out_shape=jax.ShapeDtypeStruct((num_tiles, 8, 128), jnp.float32),
        grid=(num_tiles,),
        in_specs=[
            pl.BlockSpec((tile_n, c), lambda i: (i, 0)),   # logits tile
            pl.BlockSpec((tile_n, 1), lambda i: (i, 0)),   # targets tile
        ],
        out_specs=pl.BlockSpec((1, 8, 128), lambda i: (i, 0, 0)),
        compiler_params=pltpu.CompilerParams(
            dimension_semantics=("parallel",),
            vmem_limit_bytes=32 * 1024 * 1024,
        ),
        cost_estimate=cost,
    )(outputs, targets2d)

    # Tiny final reduction (num_tiles scalars) + mean outside the kernel.
    return jnp.sum(partials[:, 0, 0]) / jnp.float32(n)


def _reference_focal_loss(outputs, targets, gamma=2.0):
    logp = jax.nn.log_softmax(outputs.astype(jnp.float32), axis=-1)
    logpt = jnp.take_along_axis(logp, targets[:, None].astype(jnp.int32), axis=-1)[:, 0]
    pt = jnp.exp(logpt)
    return jnp.mean(-((1.0 - pt) ** gamma) * logpt)


if __name__ == "__main__":
    key = jax.random.PRNGKey(0)
    k1, k2 = jax.random.split(key)

    N, C = 8, 32                      # small shapes: batch=8, num_classes=32
    GAMMA = 2.0                       # deterministic "parameter" from __init__(gamma)

    outputs = jax.random.normal(k1, (N, C), dtype=jnp.float32)
    targets = jax.random.randint(k2, (N,), 0, C, dtype=jnp.int32)

    loss = focal_loss(outputs, targets, gamma=GAMMA)
    loss = jax.block_until_ready(loss)

    ref = _reference_focal_loss(outputs, targets, gamma=GAMMA)
    assert jnp.allclose(loss, ref, rtol=1e-5, atol=1e-5), (loss, ref)

    print("KERNEL_OK")
</pallas_src>

<mosaic_0001>
module attributes {stable_mosaic.version = 11 : i64} {
  func.func @_focal_loss_kernel(%arg0: i32, %arg1: memref<8x32xf32, #tpu.memory_space<vmem>>, %arg2: memref<8x1xi32, #tpu.memory_space<vmem>>, %arg3: memref<1x8x128xf32, #tpu.memory_space<vmem>>) attributes {dimension_semantics = [#tpu.dimension_semantics<parallel>], iteration_bounds = array<i64: 1>, scalar_prefetch = 0 : i64, scratch_operands = 0 : i64, tpu.core_type = #tpu.core_type<tc>, window_params = [{transform_indices = @transform_0, window_bounds = array<i64: 8, 32>}, {transform_indices = @transform_1, window_bounds = array<i64: 8, 1>}, {transform_indices = @transform_2, window_bounds = array<i64: 1, 8, 128>}]} {
    %c0 = arith.constant 0 : index
    %c0_0 = arith.constant 0 : index
    %0 = vector.load %arg1[%c0, %c0_0] : memref<8x32xf32, #tpu.memory_space<vmem>>, vector<8x32xf32>
    %c0_1 = arith.constant 0 : index
    %c0_2 = arith.constant 0 : index
    %1 = vector.load %arg2[%c0_1, %c0_2] : memref<8x1xi32, #tpu.memory_space<vmem>>, vector<8x1xi32>
    %cst = arith.constant dense<0xFF800000> : vector<8xf32>
    %2 = vector.multi_reduction <maximumf>, %0, %cst [1] : vector<8x32xf32> to vector<8xf32>
    %3 = vector.shape_cast %2 : vector<8xf32> to vector<8x1xf32>
    %4 = vector.broadcast %3 : vector<8x1xf32> to vector<8x32xf32>
    %5 = arith.subf %0, %4 : vector<8x32xf32>
    %6 = math.exp %5 : vector<8x32xf32>
    %cst_3 = arith.constant dense<0.000000e+00> : vector<8xf32>
    %7 = vector.multi_reduction <add>, %6, %cst_3 [1] : vector<8x32xf32> to vector<8xf32>
    %8 = vector.shape_cast %7 : vector<8xf32> to vector<8x1xf32>
    %9 = math.log %8 : vector<8x1xf32>
    %10 = tpu.iota {dimensions = array<i32: 1>} : vector<8x32xi32>
    %11 = vector.broadcast %1 : vector<8x1xi32> to vector<8x32xi32>
    %12 = arith.cmpi eq, %10, %11 : vector<8x32xi32>
    %cst_4 = arith.constant 0.000000e+00 : f32
    %13 = vector.broadcast %cst_4 : f32 to vector<8x32xf32>
    %14 = arith.select %12, %5, %13 : vector<8x32xi1>, vector<8x32xf32>
    %cst_5 = arith.constant dense<0.000000e+00> : vector<8xf32>
    %15 = vector.multi_reduction <add>, %14, %cst_5 [1] : vector<8x32xf32> to vector<8xf32>
    %16 = vector.shape_cast %15 : vector<8xf32> to vector<8x1xf32>
    %17 = arith.subf %16, %9 : vector<8x1xf32>
    %18 = math.exp %17 : vector<8x1xf32>
    %cst_6 = arith.constant 1.000000e+00 : f32
    %19 = vector.broadcast %cst_6 : f32 to vector<8x1xf32>
    %20 = arith.subf %19, %18 : vector<8x1xf32>
    %cst_7 = arith.constant 0.000000e+00 : f32
    %21 = vector.broadcast %cst_7 : f32 to vector<8x1xf32>
    %22 = arith.maximumf %20, %21 : vector<8x1xf32>
    %cst_8 = arith.constant 1.000000e+00 : f32
    %23 = vector.broadcast %cst_8 : f32 to vector<8x1xf32>
    %24 = arith.mulf %23, %22 : vector<8x1xf32>
    %25 = arith.mulf %24, %22 : vector<8x1xf32>
    %cst_9 = arith.constant 0.000000e+00 : f32
    %26 = vector.broadcast %cst_9 : f32 to vector<8x1xf32>
    %27 = arith.subf %26, %25 : vector<8x1xf32>
    %28 = arith.mulf %27, %17 : vector<8x1xf32>
    %c8_i32 = arith.constant 8 : i32
    %29 = arith.muli %arg0, %c8_i32 : i32
    %30 = tpu.iota {dimensions = array<i32: 0>} : vector<8x1xi32>
    %31 = vector.broadcast %29 : i32 to vector<8x1xi32>
    %32 = arith.addi %31, %30 : vector<8x1xi32>
    %c8_i32_10 = arith.constant 8 : i32
    %33 = vector.broadcast %c8_i32_10 : i32 to vector<8x1xi32>
    %34 = arith.cmpi slt, %32, %33 : vector<8x1xi32>
    %cst_11 = arith.constant 0.000000e+00 : f32
    %35 = vector.broadcast %cst_11 : f32 to vector<8x1xf32>
    %36 = arith.select %34, %28, %35 : vector<8x1xi1>, vector<8x1xf32>
    %37 = vector.shape_cast %36 : vector<8x1xf32> to vector<1x8x1xf32>
    %cst_12 = arith.constant dense<0.000000e+00> : vector<1xf32>
    %38 = vector.multi_reduction <add>, %37, %cst_12 [1, 2] : vector<1x8x1xf32> to vector<1xf32>
    %39 = vector.shape_cast %38 : vector<1xf32> to vector<1x1x1xf32>
    %40 = vector.extract %39[0, 0, 0] : f32 from vector<1x1x1xf32>
    %41 = vector.broadcast %40 : f32 to vector<1x8x128xf32>
    %c0_13 = arith.constant 0 : index
    %c0_14 = arith.constant 0 : index
    %c0_15 = arith.constant 0 : index
    %42 = vector.load %arg3[%c0_13, %c0_14, %c0_15] : memref<1x8x128xf32, #tpu.memory_space<vmem>>, vector<1x8x128xf32>
    tpu.vector_store %arg3[%c0_13, %c0_14, %c0_15], %41 {strides = array<i32>} : memref<1x8x128xf32, #tpu.memory_space<vmem>>, vector<1x8x128xf32>,
    return
  }
  func.func @transform_0(%arg0: i32) -> (i32, i32) {
    %c0_i32 = arith.constant 0 : i32
    %c0_i32_0 = arith.constant 0 : i32
    return %arg0, %c0_i32 : i32, i32
  }
  func.func @transform_1(%arg0: i32) -> (i32, i32) {
    %c0_i32 = arith.constant 0 : i32
    %c0_i32_0 = arith.constant 0 : i32
    return %arg0, %c0_i32 : i32, i32
  }
  func.func @transform_2(%arg0: i32) -> (i32, i32, i32) {
    %c0_i32 = arith.constant 0 : i32
    %c0_i32_0 = arith.constant 0 : i32
    %c0_i32_1 = arith.constant 0 : i32
    return %arg0, %c0_i32, %c0_i32_0 : i32, i32, i32
  }
}

</mosaic_0001>

<llo_original>
// kernel: tpu_custom_call.1
$region0: #{tpu_custom_call.1}
  #allocation0 [shape = 'u32[]', space=smem, size = 0x4, offset = 0x4, fixed_abs, tag = 'smem constant byte address 0x4 - core index']
  #allocation1 [shape = 'u32[144,128]{1,0:T(1,128)}', space=vmem, size = 0x12000, scoped, tag = 'internal scratch']
  %s0 = inlined_call_operand.vmem [shape: f32[8,32], index: 0, kind: input, shape index: {}]
  %s1 = inlined_call_operand.vmem [shape: s32[8,1], index: 1, kind: input, shape index: {}]
  %s2 = inlined_call_operand.hbm [shape: f32[1,8,128], index: 2, kind: output, shape index: {}]
  %s3 = sld [smem:[#allocation0]]
  $region18: #{tpu_custom_call.1} parent=0
    _
  %s5 = ssub.s32 1, %s3
  %s6 = scalar_select 0, %s5, %s3
  $region1: #{tpu_custom_call.1} parent=0
    #allocation2 [shape = 'u8[4096]{0}', space=vmem, size = 0x1000, scoped, tag = 'output window, operand 0, single buffered']
    #allocation3 [shape = 's32[1]{0}', space=sflag, size = 0x4, scoped, tag = 'scoped memory for tpu_custom_call.1']
    %7 = vsyncpa [#allocation3], 0
    // Predicated region
    $region2: #{tpu_custom_call.1} parent=1 // pred_check
      _
    $region3: #{tpu_custom_call.1} parent=1 // pred_check_branch
      %9 = sbr.rel (0) target = $region5
    $region4: #{tpu_custom_call.1} parent=1 // pred_region
      _
    $region5: #{tpu_custom_call.1} parent=1 // pred_fallthru
      _
    // Predicated region
    $region6: #{tpu_custom_call.1} parent=1 // pred_check
      _
    $region7: #{tpu_custom_call.1} parent=1 // pred_check_branch
      %11 = sbr.rel (0) target = $region9
    $region8: #{tpu_custom_call.1} parent=1 // pred_region
      _
    $region9: #{tpu_custom_call.1} parent=1 // pred_fallthru
      _
    %v12 = vld [vmem:[%s0] sm:$0xff]
    %v13 = vld [vmem:[%s1] sm:$0xff]
    %vm14 = vcmask 261120
    %v15 = vsel %vm14, %v12, -inf
    %16 = vmax.xlane.f32.xlu0 %v15
    %v17 = vpop.xlane.xlu0 %16
    %v18 = vsub.f32 %v12, %v17
    %v19 = vmul.f32 %v18, 1.442695
    %v20 = vpow.pop %v19
    %v21 = vsel %vm14, %v20, 0.0
    %22 = vadd.xlane.f32.xlu0 %v21
    %v23 = vpop.xlane.xlu0 %22
    %v24 = vlog2.pop %v23
    %v25 = vmul.f32 %v24, 0.6931472
    %v26 = vlaneseq
    %v27 = vand.u32 %v26, 127
    %28 = vset.pattern.permute.xlu0 0
    %29 = vperm.xlu0 %28, %v13
    %v30 = vpop.permute.xlu0 %29
    %vm31 = vcmp.eq.s32.totalorder %v27, %v30
    %v32 = vsel %vm31, %v18, 0.0
    %v33 = vsel %vm14, %v32, 0.0
    %34 = vadd.xlane.f32.xlu0 %v33
    %v35 = vpop.xlane.xlu0 %34
    %v36 = vsub.f32 %v35, %v25
    %v37 = vmul.f32 %v36, 1.442695
    %v38 = vpow.pop %v37
    %v39 = vsub.f32 1.0, %v38
    %v40 = vmax.f32 %v39, 0.0
    %v41 = vmul.f32 %v40, %v40
    %v42 = vsub.f32 0.0, %v41
    %v43 = vmul.f32 %v42, %v36
    %s44 = smul.u32 0, 8
    %v45 = vlaneseq
    %v46 = vshrl.u32 %v45, 7
    %v47 = vstv %s44
    %v48 = vadd.s32 %v47, %v46
    %vm49 = vcmp.lt.s32.totalorder %v48, 8
    %v50 = vsel %vm49, %v43, 0.0
    %vm51 = vcmask 7168
    %v52 = vsel %vm51, %v50, 0.0
    %53 = vadd.xlane.f32.xlu0 %v52
    %v54 = vpop.xlane.xlu0 %53
    %v55 = vrot.slane %v54, 4
    %v56 = vadd.f32 %v54, %v55
    %v57 = vrot.slane %v56, 2
    %v58 = vadd.f32 %v56, %v57
    %v59 = vrot.slane %v58, 1
    %v60 = vadd.f32 %v58, %v59
    %s61 = vtos %v60
    %v62 = vstv %s61
    %63 = vst [vmem:[#allocation2] sm:$0xff] %v62
    // Predicated region
    $region10: #{tpu_custom_call.1} parent=1 // pred_check
      _
    $region11: #{tpu_custom_call.1} parent=1 // pred_check_branch
      %65 = sbr.rel (0) target = $region13
    $region12: #{tpu_custom_call.1} parent=1 // pred_region
      %s67 = ssub.s32 128, 128
      %68 = vsyncadd [#allocation3], %s67
      %s70 = sshll.u32 [#allocation2], 4
      %s71 = int_to_ptr.vmem [resolvable:$true] %s70
      %73 = dma.vmem_to_hbm [thread:$0]  %s71, 128, %s2, [#allocation3]
    $region13: #{tpu_custom_call.1} parent=1 // pred_fallthru
      _
    // Predicated region
    $region14: #{tpu_custom_call.1} parent=1 // pred_check
      _
    $region15: #{tpu_custom_call.1} parent=1 // pred_check_branch
      %75 = sbr.rel (0) target = $region17
    $region16: #{tpu_custom_call.1} parent=1 // pred_region
      %76 = dma.done [#allocation3], 128
    $region17: #{tpu_custom_call.1} parent=1 // pred_fallthru
      _
    %77 = vsyncpa [#allocation3], 1

</llo_original>
